<compile_context>
chip_gen: v5e
topology: v5e:2x2
jax: 0.10.0
libtpu: 0.0.40
codegen_flags: <defaults>
</compile_context>

<pallas_src>
import jax
import jax.numpy as jnp
import numpy as np
from jax.experimental import pallas as pl
from jax.experimental.pallas import tpu as pltpu


def _return_preds_kernel(preds_ref, out_ref):
    # forward(x): return self.preds  -- pure passthrough of the stored preds.
    out_ref[...] = preds_ref[...]


def mock_module_forward(x, preds):
    """Pallas-backed MockModuleReturnMockedPreds.forward.

    Accepts `x` to mirror the torch signature but never reads it (and never
    DMAs it).  Returns `preds` materialized through a single lane-dense VMEM
    tile whose HBM buffer is aliased to the preds operand.
    """
    del x  # unused by forward(), exactly like the reference module.

    n = int(np.prod(preds.shape))
    preds_2d = preds.reshape(1, n)  # lane-dense (long axis last) slab

    out_2d = pl.pallas_call(
        _return_preds_kernel,
        out_shape=jax.ShapeDtypeStruct((1, n), preds.dtype),
        in_specs=[pl.BlockSpec(memory_space=pltpu.MemorySpace.VMEM)],
        out_specs=pl.BlockSpec(memory_space=pltpu.MemorySpace.VMEM),
        input_output_aliases={0: 0},  # preds buffer doubles as the output
    )(preds_2d)

    return out_2d.reshape(preds.shape)


def make_final_layer_params(n_chans, n_outputs, n_times, key):
    """Deterministic init of the (unused-in-forward) Conv1d final_layer.

    torch.nn.Conv1d(n_chans, n_outputs, kernel_size=n_times):
      weight: (n_outputs, n_chans, n_times), bias: (n_outputs,)
    """
    kw, kb = jax.random.split(key)
    fan_in = n_chans * n_times
    bound = 1.0 / np.sqrt(fan_in)
    weight = jax.random.uniform(
        kw, (n_outputs, n_chans, n_times), jnp.float32, -bound, bound
    )
    bias = jax.random.uniform(kb, (n_outputs,), jnp.float32, -bound, bound)
    return weight, bias


if __name__ == "__main__":
    key = jax.random.PRNGKey(0)

    # Fixture preds from the test (shape (5, 2, 4)).
    preds_np = np.array(
        [
            [[0.2, 0.1, 0.1, 0.1], [0.8, 0.9, 0.9, 0.9]],
            [[0.2, 0.1, 0.1, 0.1], [0.8, 0.9, 0.9, 0.9]],
            [[1.0, 1.0, 1.0, 1.0], [0.0, 0.0, 0.0, 0.0]],
            [[1.0, 1.0, 1.0, 0.2], [0.0, 0.0, 0.0, 0.8]],
            [[0.9, 0.8, 0.9, 1.0], [0.1, 0.2, 0.1, 0.0]],
        ],
        dtype=np.float32,
    )
    preds = jnp.asarray(preds_np)

    # EEG-ish hyperparameters consistent with the module.
    batch, n_chans, n_times, n_outputs = 2, 4, 16, 2

    # Parameters of the final_layer (deterministic init).
    # TODO(synk): final_layer is constructed but never applied in the reference
    # forward(), so these parameters are intentionally unused by the kernel.
    w, b = make_final_layer_params(n_chans, n_outputs, n_times, key)

    # Deterministic example input x (ignored by forward, as in the reference).
    x = jax.random.normal(
        jax.random.fold_in(key, 1), (batch, n_chans, n_times), dtype=jnp.float32
    )

    out = mock_module_forward(x, preds)
    out = jax.block_until_ready(out)

    assert out.shape == preds.shape
    assert out.dtype == preds.dtype
    np.testing.assert_allclose(np.asarray(out), preds_np, rtol=0, atol=0)

    print("KERNEL_OK")
</pallas_src>

<mosaic_0001>
module attributes {stable_mosaic.version = 11 : i64} {
  func.func @_return_preds_kernel(%arg0: memref<1x40xf32, #tpu.memory_space<vmem>>, %arg1: memref<1x40xf32, #tpu.memory_space<vmem>>) attributes {dimension_semantics = [], scalar_prefetch = 0 : i64, scratch_operands = 0 : i64, tpu.core_type = #tpu.core_type<tc>} {
    %c0 = arith.constant 0 : index
    %c0_0 = arith.constant 0 : index
    %0 = vector.load %arg0[%c0, %c0_0] : memref<1x40xf32, #tpu.memory_space<vmem>>, vector<1x40xf32>
    %c0_1 = arith.constant 0 : index
    %c0_2 = arith.constant 0 : index
    %1 = vector.load %arg1[%c0_1, %c0_2] : memref<1x40xf32, #tpu.memory_space<vmem>>, vector<1x40xf32>
    tpu.vector_store %arg1[%c0_1, %c0_2], %0 {strides = array<i32>} : memref<1x40xf32, #tpu.memory_space<vmem>>, vector<1x40xf32>,
    return
  }
}

</mosaic_0001>

<llo_original>
// kernel: tpu_custom_call.1
$region0: #{tpu_custom_call.1}
  #allocation0 [shape = 'u32[]', space=smem, size = 0x4, offset = 0x4, fixed_abs, tag = 'smem constant byte address 0x4 - core index']
  #allocation1 [shape = 'u32[72,128]{1,0:T(1,128)}', space=vmem, size = 0x9000, scoped, tag = 'internal scratch']
  %s0 = inlined_call_operand.hbm [shape: f32[1,40], index: 0, kind: input, shape index: {}, may-alias: {0,1}]
  %s1 = inlined_call_operand.hbm [shape: f32[1,40], index: 1, kind: output, shape index: {}, may-alias: {0,1}]
  %s2 = sld [smem:[#allocation0]]
  $region18: #{tpu_custom_call.1} parent=0
    _
  %s4 = ssub.s32 1, %s2
  %s5 = scalar_select 0, %s4, %s2
  $region1: #{tpu_custom_call.1} parent=0
    #allocation2 [shape = 'u8[512]{0}', space=vmem, size = 0x400, scoped, tag = 'input window, operand 0, single buffered']
    #allocation3 [shape = 's32[1]{0}', space=sflag, size = 0x4, scoped, tag = 'scoped memory for tpu_custom_call.1']
    #allocation4 [shape = 's32[1]{0}', space=sflag, size = 0x4, scoped, tag = 'scoped memory for tpu_custom_call.1']
    #allocation5 [shape = 'u8[512]{0}', space=vmem, size = 0x400, scoped, tag = 'output window, operand 0, single buffered']
    %6 = vsyncpa [#allocation3], 0
    %7 = vsyncpa [#allocation4], 0
    // Predicated region
    $region2: #{tpu_custom_call.1} parent=1 // pred_check
      _
    $region3: #{tpu_custom_call.1} parent=1 // pred_check_branch
      %9 = sbr.rel (0) target = $region5
    $region4: #{tpu_custom_call.1} parent=1 // pred_region
      %11 = vsyncadd [#allocation3], 0
      %s13 = sshll.u32 %s0, 4
      %s14 = int_to_ptr.hbm [resolvable:$true] %s13
      %s15 = sshll.u32 [#allocation2], 4
      %s16 = int_to_ptr.vmem [resolvable:$true] %s15
      %18 = dma.hbm_to_vmem [thread:$0]  %s14, 16, %s16, [#allocation3]
    $region5: #{tpu_custom_call.1} parent=1 // pred_fallthru
      _
    // Predicated region
    $region6: #{tpu_custom_call.1} parent=1 // pred_check
      _
    $region7: #{tpu_custom_call.1} parent=1 // pred_check_branch
      %20 = sbr.rel (0) target = $region9
    $region8: #{tpu_custom_call.1} parent=1 // pred_region
      %22 = dma.done [#allocation3], 16
    $region9: #{tpu_custom_call.1} parent=1 // pred_fallthru
      _
    %v23 = vld [vmem:[#allocation2] sm:$0x1]
    %vm24 = vcmask 319488
    %25 = vst.msk [vmem:[#allocation5] sm:$0x1] %vm24, %v23
    // Predicated region
    $region10: #{tpu_custom_call.1} parent=1 // pred_check
      _
    $region11: #{tpu_custom_call.1} parent=1 // pred_check_branch
      %27 = sbr.rel (0) target = $region13
    $region12: #{tpu_custom_call.1} parent=1 // pred_region
      %29 = vsyncadd [#allocation4], 0
      %s31 = sshll.u32 [#allocation5], 4
      %s32 = int_to_ptr.vmem [resolvable:$true] %s31
      %s33 = sshll.u32 %s1, 4
      %s34 = int_to_ptr.hbm [resolvable:$true] %s33
      %36 = dma.vmem_to_hbm [thread:$0]  %s32, 16, %s34, [#allocation4]
    $region13: #{tpu_custom_call.1} parent=1 // pred_fallthru
      _
    // Predicated region
    $region14: #{tpu_custom_call.1} parent=1 // pred_check
      _
    $region15: #{tpu_custom_call.1} parent=1 // pred_check_branch
      %38 = sbr.rel (0) target = $region17
    $region16: #{tpu_custom_call.1} parent=1 // pred_region
      %40 = dma.done [#allocation4], 16
    $region17: #{tpu_custom_call.1} parent=1 // pred_fallthru
      _
    %41 = vsyncpa [#allocation3], 1
    %42 = vsyncpa [#allocation4], 1

</llo_original>
